<compile_context>
chip_gen: v7x
topology: tpu7x:2x2x1
jax: 0.10.0
libtpu: 0.0.40
codegen_flags: <defaults>
</compile_context>

<pallas_src>
import functools

import jax
import jax.numpy as jnp
from jax.experimental import pallas as pl
from jax.experimental.pallas import tpu as pltpu


def _round_up(x, m):
    return ((x + m - 1) // m) * m


# ---------------------------------------------------------------------------
# Kernel 1: im2col GEMM + LeakyReLU + per-tile BN partial statistics.
# ---------------------------------------------------------------------------
def _conv_act_stats_kernel(patch_ref, w_ref, act_ref, stats_ref, *, neg_slope):
    # patch_ref: (TR, Kp)  bf16   w_ref: (Kp, Cp) bf16 (resident)
    # act_ref:   (TR, Cp)  f32    stats_ref: (8, Cp) f32  (row0=sum, row1=sumsq)
    y = jnp.dot(patch_ref[...], w_ref[...], preferred_element_type=jnp.float32)
    a = jnp.where(y >= 0.0, y, neg_slope * y)          # LeakyReLU in f32 (VPU)
    act_ref[...] = a

    s = jnp.sum(a, axis=0, keepdims=True)              # (1, Cp)
    ss = jnp.sum(a * a, axis=0, keepdims=True)         # (1, Cp)
    zeros6 = jnp.zeros((6, a.shape[1]), dtype=jnp.float32)
    stats_ref[...] = jnp.concatenate([s, ss, zeros6], axis=0)


# ---------------------------------------------------------------------------
# Kernel 2: apply the (global) BatchNorm scale/shift per row-tile.
# ---------------------------------------------------------------------------
def _bn_apply_kernel(act_ref, scale_ref, shift_ref, out_ref):
    out_ref[...] = act_ref[...] * scale_ref[...] + shift_ref[...]


def conv2d_forward(x_nchw, w_oihw, gamma, beta, *, stride=1, padding=0,
                   negative_slope=0.1, eps=1e-5, row_tile=512):
    """Equivalent of Conv2D.forward (NCHW in, NCHW out)."""
    if isinstance(stride, int):
        stride = (stride, stride)
    if isinstance(padding, int):
        padding = (padding, padding)

    N, Cin, H, W = x_nchw.shape
    Cout, Cin_w, KH, KW = w_oihw.shape
    assert Cin == Cin_w
    sh, sw = stride
    ph, pw = padding
    Ho = (H + 2 * ph - KH) // sh + 1
    Wo = (W + 2 * pw - KW) // sw + 1

    # ---- glue: layout conversion, conv zero-padding, im2col patch gather ----
    x = jnp.transpose(x_nchw, (0, 2, 3, 1))                     # NHWC
    x = jnp.pad(x, ((0, 0), (ph, ph), (pw, pw), (0, 0)))
    taps = []
    for kh in range(KH):
        for kw in range(KW):
            taps.append(jax.lax.slice(
                x,
                (0, kh, kw, 0),
                (N, kh + sh * (Ho - 1) + 1, kw + sw * (Wo - 1) + 1, Cin),
                (1, sh, sw, 1)))                                # (N,Ho,Wo,Cin)
    K = KH * KW * Cin
    R = N * Ho * Wo
    patch = jnp.concatenate(taps, axis=-1).reshape(R, K)        # tap-major, cin fastest
    w = jnp.transpose(w_oihw, (2, 3, 1, 0)).reshape(K, Cout)    # matches patch order

    # ---- pad to lane/tile-friendly shapes; cast MXU operands to bf16 ----
    row_tile = max(8, min(row_tile, _round_up(R, 8)))
    Rp = _round_up(R, row_tile)
    Kp = _round_up(K, 128)
    Cp = _round_up(Cout, 128)
    n_tiles = Rp // row_tile

    patch_p = jnp.zeros((Rp, Kp), jnp.bfloat16).at[:R, :K].set(
        patch.astype(jnp.bfloat16))
    w_p = jnp.zeros((Kp, Cp), jnp.bfloat16).at[:K, :Cout].set(
        w.astype(jnp.bfloat16))

    cparams = pltpu.CompilerParams(
        dimension_semantics=("parallel",),
        vmem_limit_bytes=32 * 1024 * 1024,
    )

    # ---- pass 1: conv GEMM + LeakyReLU + per-tile BN partial stats ----
    act, stats = pl.pallas_call(
        functools.partial(_conv_act_stats_kernel, neg_slope=negative_slope),
        out_shape=(
            jax.ShapeDtypeStruct((Rp, Cp), jnp.float32),
            jax.ShapeDtypeStruct((n_tiles * 8, Cp), jnp.float32),
        ),
        grid=(n_tiles,),
        in_specs=[
            pl.BlockSpec((row_tile, Kp), lambda i: (i, 0)),     # patch tile
            pl.BlockSpec((Kp, Cp), lambda i: (0, 0)),           # weights (resident)
        ],
        out_specs=(
            pl.BlockSpec((row_tile, Cp), lambda i: (i, 0)),     # activation tile
            pl.BlockSpec((8, Cp), lambda i: (i, 0)),            # per-tile stats
        ),
        compiler_params=cparams,
    )(patch_p, w_p)

    # ---- tiny cross-tile reduction + per-channel BN scale/shift (glue) ----
    stats = stats.reshape(n_tiles, 8, Cp)
    ch_sum = jnp.sum(stats[:, 0, :], axis=0)                    # (Cp,)
    ch_sq = jnp.sum(stats[:, 1, :], axis=0)                     # (Cp,)
    count = jnp.float32(R)                                      # padded rows are zero
    mean = ch_sum / count
    var = jnp.maximum(ch_sq / count - mean * mean, 0.0)         # biased variance
    gamma_p = jnp.zeros((Cp,), jnp.float32).at[:Cout].set(gamma.astype(jnp.float32))
    beta_p = jnp.zeros((Cp,), jnp.float32).at[:Cout].set(beta.astype(jnp.float32))
    scale = gamma_p * jax.lax.rsqrt(var + eps)
    shift = beta_p - mean * scale

    # ---- pass 2: apply BN affine, tiled and lane-dense ----
    out_flat = pl.pallas_call(
        _bn_apply_kernel,
        out_shape=jax.ShapeDtypeStruct((Rp, Cp), jnp.float32),
        grid=(n_tiles,),
        in_specs=[
            pl.BlockSpec((row_tile, Cp), lambda i: (i, 0)),     # activation tile
            pl.BlockSpec((1, Cp), lambda i: (0, 0)),            # scale (resident)
            pl.BlockSpec((1, Cp), lambda i: (0, 0)),            # shift (resident)
        ],
        out_specs=pl.BlockSpec((row_tile, Cp), lambda i: (i, 0)),
        compiler_params=cparams,
    )(act, scale.reshape(1, Cp), shift.reshape(1, Cp))

    out = out_flat[:R, :Cout].reshape(N, Ho, Wo, Cout)
    return jnp.transpose(out, (0, 3, 1, 2))                     # back to NCHW


def _reference(x_nchw, w_oihw, gamma, beta, *, stride=(1, 1), padding=(0, 0),
               negative_slope=0.1, eps=1e-5):
    """Pure-JAX reference (bf16 MXU operands, f32 accumulation, like the kernel)."""
    y = jax.lax.conv_general_dilated(
        x_nchw.astype(jnp.bfloat16), w_oihw.astype(jnp.bfloat16),
        window_strides=stride,
        padding=[(padding[0], padding[0]), (padding[1], padding[1])],
        dimension_numbers=("NCHW", "OIHW", "NCHW"),
        preferred_element_type=jnp.float32,
    )
    a = jnp.where(y >= 0, y, negative_slope * y)
    mean = jnp.mean(a, axis=(0, 2, 3), keepdims=True)
    var = jnp.mean((a - mean) ** 2, axis=(0, 2, 3), keepdims=True)
    out = (a - mean) * jax.lax.rsqrt(var + eps)
    return out * gamma.reshape(1, -1, 1, 1) + beta.reshape(1, -1, 1, 1)


if __name__ == "__main__":
    key = jax.random.PRNGKey(0)
    kx, kw = jax.random.split(key)

    # Module config: Conv2D(in_channels=4, out_channels=8) with defaults
    # (kernel_size=3, stride=1, padding=0, LeakyReLU(0.1), batch norm on).
    N, Cin, H, W = 2, 4, 16, 16
    Cout, KH, KW = 8, 3, 3
    stride, padding = (1, 1), (0, 0)

    x = jax.random.normal(kx, (N, Cin, H, W), dtype=jnp.float32)
    fan_in = Cin * KH * KW
    w = jax.random.normal(kw, (Cout, Cin, KH, KW), dtype=jnp.float32) / jnp.sqrt(fan_in)
    gamma = jnp.ones((Cout,), dtype=jnp.float32)    # fresh BatchNorm2d weight
    beta = jnp.zeros((Cout,), dtype=jnp.float32)    # fresh BatchNorm2d bias

    # row_tile=128 here so the small demo still exercises a multi-tile grid and
    # the cross-tile BN statistics reduction; default (512) is the perf choice.
    out = conv2d_forward(x, w, gamma, beta, stride=stride, padding=padding,
                         row_tile=128)
    out = jax.block_until_ready(out)

    ref = _reference(x, w, gamma, beta, stride=stride, padding=padding)
    assert out.shape == ref.shape == (N, Cout, H - KH + 1, W - KW + 1)
    max_err = float(jnp.max(jnp.abs(out - ref)))
    assert jnp.allclose(out, ref, atol=5e-3, rtol=5e-3), max_err

    print("KERNEL_OK")
</pallas_src>

<mosaic_0001>
module attributes {stable_mosaic.version = 11 : i64} {
  func.func @_conv_act_stats_kernel(%arg0: i32, %arg1: memref<128x128xbf16, #tpu.memory_space<vmem>>, %arg2: memref<128x128xbf16, #tpu.memory_space<vmem>>, %arg3: memref<128x128xf32, #tpu.memory_space<vmem>>, %arg4: memref<8x128xf32, #tpu.memory_space<vmem>>) attributes {dimension_semantics = [#tpu.dimension_semantics<parallel>], iteration_bounds = array<i64: 4>, scalar_prefetch = 0 : i64, scratch_operands = 0 : i64, tpu.core_type = #tpu.core_type<tc>, window_params = [{transform_indices = @transform_0, window_bounds = array<i64: 128, 128>}, {pipeline_mode = #tpu.pipeline_mode<synchronous>, transform_indices = @transform_1, window_bounds = array<i64: 128, 128>}, {transform_indices = @transform_2, window_bounds = array<i64: 128, 128>}, {transform_indices = @transform_3, window_bounds = array<i64: 8, 128>}]} {
    %c0 = arith.constant 0 : index
    %c0_0 = arith.constant 0 : index
    %0 = vector.load %arg1[%c0, %c0_0] : memref<128x128xbf16, #tpu.memory_space<vmem>>, vector<128x128xbf16>
    %c0_1 = arith.constant 0 : index
    %c0_2 = arith.constant 0 : index
    %1 = vector.load %arg2[%c0_1, %c0_2] : memref<128x128xbf16, #tpu.memory_space<vmem>>, vector<128x128xbf16>
    %cst = arith.constant dense<0.000000e+00> : vector<128x128xf32>
    %2 = tpu.matmul %0, %1, %cst {dimension_numbers = #tpu.dot_dimension_numbers<[1], [0], [0], [1], [0, 0, 1, 1], [], []>} : vector<128x128xbf16>, vector<128x128xbf16>, vector<128x128xf32> -> vector<128x128xf32>
    %cst_3 = arith.constant 0.000000e+00 : f32
    %3 = vector.broadcast %cst_3 : f32 to vector<128x128xf32>
    %4 = arith.cmpf oge, %2, %3 : vector<128x128xf32>
    %cst_4 = arith.constant 1.000000e-01 : f32
    %5 = vector.broadcast %cst_4 : f32 to vector<128x128xf32>
    %6 = arith.mulf %5, %2 : vector<128x128xf32>
    %7 = arith.select %4, %2, %6 : vector<128x128xi1>, vector<128x128xf32>
    %c0_5 = arith.constant 0 : index
    %c0_6 = arith.constant 0 : index
    %8 = vector.load %arg3[%c0_5, %c0_6] : memref<128x128xf32, #tpu.memory_space<vmem>>, vector<128x128xf32>
    tpu.vector_store %arg3[%c0_5, %c0_6], %7 {strides = array<i32>} : memref<128x128xf32, #tpu.memory_space<vmem>>, vector<128x128xf32>,
    %cst_7 = arith.constant dense<0.000000e+00> : vector<128xf32>
    %9 = vector.multi_reduction <add>, %7, %cst_7 [0] : vector<128x128xf32> to vector<128xf32>
    %10 = vector.shape_cast %9 : vector<128xf32> to vector<1x128xf32>
    %11 = arith.mulf %7, %7 : vector<128x128xf32>
    %cst_8 = arith.constant dense<0.000000e+00> : vector<128xf32>
    %12 = vector.multi_reduction <add>, %11, %cst_8 [0] : vector<128x128xf32> to vector<128xf32>
    %13 = vector.shape_cast %12 : vector<128xf32> to vector<1x128xf32>
    %cst_9 = arith.constant 0.000000e+00 : f32
    %14 = vector.broadcast %cst_9 : f32 to vector<6x128xf32>
    %15 = tpu.concatenate %10, %13, %14 in 0 : vector<1x128xf32>, vector<1x128xf32>, vector<6x128xf32> -> vector<8x128xf32>
    %c0_10 = arith.constant 0 : index
    %c0_11 = arith.constant 0 : index
    %16 = vector.load %arg4[%c0_10, %c0_11] : memref<8x128xf32, #tpu.memory_space<vmem>>, vector<8x128xf32>
    tpu.vector_store %arg4[%c0_10, %c0_11], %15 {strides = array<i32>} : memref<8x128xf32, #tpu.memory_space<vmem>>, vector<8x128xf32>,
    return
  }
  func.func @transform_0(%arg0: i32) -> (i32, i32) {
    %c0_i32 = arith.constant 0 : i32
    %c0_i32_0 = arith.constant 0 : i32
    return %arg0, %c0_i32 : i32, i32
  }
  func.func @transform_1(%arg0: i32) -> (i32, i32) {
    %c0_i32 = arith.constant 0 : i32
    %c0_i32_0 = arith.constant 0 : i32
    %c0_i32_1 = arith.constant 0 : i32
    return %c0_i32, %c0_i32_0 : i32, i32
  }
  func.func @transform_2(%arg0: i32) -> (i32, i32) {
    %c0_i32 = arith.constant 0 : i32
    %c0_i32_0 = arith.constant 0 : i32
    return %arg0, %c0_i32 : i32, i32
  }
  func.func @transform_3(%arg0: i32) -> (i32, i32) {
    %c0_i32 = arith.constant 0 : i32
    %c0_i32_0 = arith.constant 0 : i32
    return %arg0, %c0_i32 : i32, i32
  }
}

</mosaic_0001>

<llo_original>
// kernel: tpu_custom_call.1
$region0: #{tpu_custom_call.1}
  #allocation0 [shape = 'u32[]', space=smem, size = 0x4, offset = 0x4, fixed_abs, tag = 'smem constant byte address 0x4 - core index']
  #allocation1 [shape = 'u32[144,128]{1,0:T(1,128)}', space=vmem, size = 0x12000, scoped, tag = 'internal scratch']
  %s0 = inlined_call_operand.hbm [shape: bf16[512,128], index: 0, kind: input, shape index: {}]
  %s1 = inlined_call_operand.hbm [shape: bf16[128,128], index: 1, kind: input, shape index: {}]
  %s2 = inlined_call_operand.hbm [shape: f32[512,128], index: 2, kind: output, shape index: {0}]
  %s3 = inlined_call_operand.hbm [shape: f32[32,128], index: 3, kind: output, shape index: {1}]
  %4 = xla_tuple %s2, %s3
  %s5 = sld [smem:[#allocation0]]
  $region57: #{tpu_custom_call.1} parent=0
    _
  %s7 = ssub.s32 1, %s5
  %s8 = scalar_select 0, %s7, %s5
  $region1: #{tpu_custom_call.1} parent=0
    #allocation2 [shape = 'u8[65536]{0}', space=vmem, size = 0x10000, scoped, tag = 'input window, operand 0']
    #allocation3 [shape = 's32[2]{0}', space=sflag, size = 0x8, scoped, tag = 'scoped memory for tpu_custom_call.1']
    #allocation4 [shape = 's32[2]{0}', space=sflag, size = 0x8, scoped, tag = 'scoped memory for tpu_custom_call.1']
    #allocation5 [shape = 'u8[32768]{0}', space=vmem, size = 0x8000, scoped, tag = 'input window, operand 1, single buffered']
    #allocation6 [shape = 's32[1]{0}', space=sflag, size = 0x4, scoped, tag = 'scoped memory for tpu_custom_call.1']
    #allocation7 [shape = 'u8[131072]{0}', space=vmem, size = 0x20000, scoped, tag = 'output window, operand 0']
    #allocation8 [shape = 'u8[8192]{0}', space=vmem, size = 0x2000, scoped, tag = 'output window, operand 1']
    #allocation9 [shape = 's32[2]{0}', space=sflag, size = 0x8, scoped, tag = 'scoped memory for tpu_custom_call.1']
    %9 = vsyncpa [#allocation3], 0
    %s10 = scalar_lea.sflag [#allocation3], 1
    %11 = vsyncpa %s10, 0
    %12 = vsyncpa [#allocation6], 0
    %13 = vsyncpa [#allocation4], 0
    %s14 = scalar_lea.sflag [#allocation4], 1
    %15 = vsyncpa %s14, 0
    %16 = vsyncpa [#allocation9], 0
    %s17 = scalar_lea.sflag [#allocation9], 1
    %18 = vsyncpa %s17, 0
    loop: start=0, step=1, limit=6
    $region2: #{tpu_custom_call.1} parent=1 // loop_pre_header
      _
    $region3: #{tpu_custom_call.1} parent=1 // loop_header
      %s20 = sphi 0, %s24
      %p21 = scmp.ge.s32.totalorder %s20, 6
      %s30 = sphi 0, %s32
      %s33 = sphi 0, %s30
      %s34 = sphi 0, %s33
      %s50 = sphi 0, %s34
      %s54 = sphi 0, %s54
      %s56 = sphi 0, %s54
      %s57 = sphi 0, %s56
      %s71 = sphi 0, %s57
      %s77 = sphi 0, %s79
      %s80 = sphi 0, %s77
      %s81 = sphi 0, %s80
      %s97 = sphi 0, %s81
      %s103 = sphi 0, %s105
      %s106 = sphi 0, %s103
      %s107 = sphi 0, %s106
      %s123 = sphi 0, %s107
    $region4: #{tpu_custom_call.1} parent=1 // loop_header_branch
      %23 = sbr.rel (%p21) target = $region8
    $region5: #{tpu_custom_call.1} parent=1 // loop_body
      %s25 = ssub.s32 %s20, 1
      %s26 = ssub.s32 %s20, 2
      %s27 = sadd.s32 %s20, 1
      %s28 = ssub.s32 %s20, %s27
      %p29 = scmp.eq.s32.totalorder %s28, 0
      %s31 = sadd.s32 %s30, 1
      %s32 = scalar_select %p29, %s30, %s31
      %p35 = pneg %p29
      %p36 = scmp.eq.s32.totalorder %s20, 3
      %p37 = por %p35, %p36
      %p38 = scmp.ne.s32.totalorder %s30, %s33
      %p39 = scmp.eq.s32.totalorder %s20, 0
      %p40 = por %p38, %p39
      %p41 = scmp.ne.s32.totalorder %s30, %s33
      %p42 = scmp.eq.s32.totalorder %s25, 3
      %p43 = por %p41, %p42
      %p44 = scmp.ne.s32.totalorder %s33, %s34
      %p45 = scmp.eq.s32.totalorder %s25, 0
      %p46 = por %p44, %p45
      %p47 = scmp.ne.s32.totalorder %s33, %s34
      %p48 = scmp.eq.s32.totalorder %s26, 3
      %p49 = por %p47, %p48
      %p51 = scmp.ne.s32.totalorder %s34, %s50
      %p52 = scmp.eq.s32.totalorder %s26, 0
      %p53 = por %p51, %p52
      %s55 = sadd.s32 %s54, 1
      %p58 = scmp.eq.s32.totalorder %s20, 3
      %p59 = scmp.ne.s32.totalorder %s54, %s56
      %p60 = scmp.eq.s32.totalorder %s20, 0
      %p61 = por %p59, %p60
      %p62 = scmp.ne.s32.totalorder %s54, %s56
      %p63 = scmp.eq.s32.totalorder %s25, 3
      %p64 = por %p62, %p63
      %p65 = scmp.ne.s32.totalorder %s56, %s57
      %p66 = scmp.eq.s32.totalorder %s25, 0
      %p67 = por %p65, %p66
      %p68 = scmp.ne.s32.totalorder %s56, %s57
      %p69 = scmp.eq.s32.totalorder %s26, 3
      %p70 = por %p68, %p69
      %p72 = scmp.ne.s32.totalorder %s57, %s71
      %p73 = scmp.eq.s32.totalorder %s26, 0
      %p74 = por %p72, %p73
      %s75 = ssub.s32 %s20, %s27
      %p76 = scmp.eq.s32.totalorder %s75, 0
      %s78 = sadd.s32 %s77, 1
      %s79 = scalar_select %p76, %s77, %s78
      %p82 = pneg %p76
      %p83 = scmp.eq.s32.totalorder %s20, 3
      %p84 = por %p82, %p83
      %p85 = scmp.ne.s32.totalorder %s77, %s80
      %p86 = scmp.eq.s32.totalorder %s20, 0
      %p87 = por %p85, %p86
      %p88 = scmp.ne.s32.totalorder %s77, %s80
      %p89 = scmp.eq.s32.totalorder %s25, 3
      %p90 = por %p88, %p89
      %p91 = scmp.ne.s32.totalorder %s80, %s81
      %p92 = scmp.eq.s32.totalorder %s25, 0
      %p93 = por %p91, %p92
      %p94 = scmp.ne.s32.totalorder %s80, %s81
      %p95 = scmp.eq.s32.totalorder %s26, 3
      %p96 = por %p94, %p95
      %p98 = scmp.ne.s32.totalorder %s81, %s97
      %p99 = scmp.eq.s32.totalorder %s26, 0
      %p100 = por %p98, %p99
      %s101 = ssub.s32 %s20, %s27
      %p102 = scmp.eq.s32.totalorder %s101, 0
      %s104 = sadd.s32 %s103, 1
      %s105 = scalar_select %p102, %s103, %s104
      %p108 = pneg %p102
      %p109 = scmp.eq.s32.totalorder %s20, 3
      %p110 = por %p108, %p109
      %p111 = scmp.ne.s32.totalorder %s103, %s106
      %p112 = scmp.eq.s32.totalorder %s20, 0
      %p113 = por %p111, %p112
      %p114 = scmp.ne.s32.totalorder %s103, %s106
      %p115 = scmp.eq.s32.totalorder %s25, 3
      %p116 = por %p114, %p115
      %p117 = scmp.ne.s32.totalorder %s106, %s107
      %p118 = scmp.eq.s32.totalorder %s25, 0
      %p119 = por %p117, %p118
      %p120 = scmp.ne.s32.totalorder %s106, %s107
      %p121 = scmp.eq.s32.totalorder %s26, 3
      %p122 = por %p120, %p121
      %p124 = scmp.ne.s32.totalorder %s107, %s123
      %p125 = scmp.eq.s32.totalorder %s26, 0
      %p126 = por %p124, %p125
      %p127 = scmp.le.s32.totalorder 1, %s20
      %p128 = scmp.lt.s32.totalorder %s20, 5
      %p129 = pnand %p127, %p128
      %p130 = pneg %p129
      // Predicated region
      $region9: #{tpu_custom_call.1} parent=5 // pred_check
        _
      $region10: #{tpu_custom_call.1} parent=5 // pred_check_branch
        %132 = sbr.rel (%p129) target = $region12
      $region11: #{tpu_custom_call.1} parent=5 // pred_region
        %s133 = ssub.s32 %s20, 1
        // Predicated region
        $region13: #{tpu_custom_call.1} parent=11 // pred_check
          %p134 = pneg %p67
        $region14: #{tpu_custom_call.1} parent=11 // pred_check_branch
          %136 = sbr.rel (%p134) target = $region16
        $region15: #{tpu_custom_call.1} parent=11 // pred_region
          %s138 = ssub.s32 1024, 1024
          %139 = vsyncadd [#allocation6], %s138
          %s140 = sshll.u32 [#allocation5], 4
          %s141 = int_to_ptr.vmem [resolvable:$true] %s140
          %146 = dma.hbm_to_vmem [thread:$0]  %s1, 1024, %s141, [#allocation6], 64, 64, 4
        $region16: #{tpu_custom_call.1} parent=11 // pred_fallthru
          _
      $region12: #{tpu_custom_call.1} parent=5 // pred_fallthru
        _
      %p147 = scmp.lt.s32.totalorder %s20, 4
      // Predicated region
      $region17: #{tpu_custom_call.1} parent=5 // pred_check
        %p148 = pneg %p147
      $region18: #{tpu_custom_call.1} parent=5 // pred_check_branch
        %150 = sbr.rel (%p148) target = $region20
      $region19: #{tpu_custom_call.1} parent=5 // pred_region
        // Predicated region
        $region21: #{tpu_custom_call.1} parent=19 // pred_check
          %p151 = pneg %p40
        $region22: #{tpu_custom_call.1} parent=19 // pred_check_branch
          %153 = sbr.rel (%p151) target = $region24
        $region23: #{tpu_custom_call.1} parent=19 // pred_region
          %s154 = sand.u32 %s30, 1
          %s155 = scalar_lea.sflag [#allocation3], %s154
          %s156 = sand.u32 %s30, 1
          %s157 = smul.addr %s156, 64
          %s158 = scalar_lea.vmem [#allocation2], %s157
          %s159 = smul.u32 16, %s20
          %s161 = ssub.s32 1024, 1024
          %162 = vsyncadd %s155, %s161
          %s163 = smul.addr %s159, 64
          %s164 = scalar_lea.hbm %s0, %s163
          %s165 = sshll.u32 %s158, 4
          %s166 = int_to_ptr.vmem [resolvable:$true] %s165
          %171 = dma.hbm_to_vmem [thread:$0]  %s164, 1024, %s166, %s155, 64, 64, 4
        $region24: #{tpu_custom_call.1} parent=19 // pred_fallthru
          _
      $region20: #{tpu_custom_call.1} parent=5 // pred_fallthru
        _
      %p172 = scmp.le.s32.totalorder 1, %s20
      %p173 = scmp.lt.s32.totalorder %s20, 5
      %p174 = pnand %p172, %p173
      %p175 = pneg %p174
      // Predicated region
      $region25: #{tpu_custom_call.1} parent=5 // pred_check
        _
      $region26: #{tpu_custom_call.1} parent=5 // pred_check_branch
        %177 = sbr.rel (%p174) target = $region28
      $region27: #{tpu_custom_call.1} parent=5 // pred_region
        %s178 = ssub.s32 %s20, 1
        %s179 = sand.u32 %s33, 1
        %s180 = scalar_lea.sflag [#allocation3], %s179
        %s181 = sand.u32 %s33, 1
        %s182 = smul.addr %s181, 64
        %s183 = scalar_lea.vmem [#allocation2], %s182
        // Predicated region
        $region29: #{tpu_custom_call.1} parent=27 // pred_check
          %p184 = pneg %p46
        $region30: #{tpu_custom_call.1} parent=27 // pred_check_branch
          %186 = sbr.rel (%p184) target = $region32
        $region31: #{tpu_custom_call.1} parent=27 // pred_region
          %187 = dma.done %s180, 1024
        $region32: #{tpu_custom_call.1} parent=27 // pred_fallthru
          _
        // Predicated region
        $region33: #{tpu_custom_call.1} parent=27 // pred_check
          %p188 = pneg %p67
        $region34: #{tpu_custom_call.1} parent=27 // pred_check_branch
          %190 = sbr.rel (%p188) target = $region36
        $region35: #{tpu_custom_call.1} parent=27 // pred_region
          %191 = dma.done [#allocation6], 1024
        $region36: #{tpu_custom_call.1} parent=27 // pred_fallthru
          _
        %s192 = sand.u32 %s33, 1
        %s193 = scalar_lea.sflag [#allocation3], %s192
        %s194 = sand.u32 %s33, 1
        %s195 = smul.addr %s194, 64
        %s196 = scalar_lea.vmem [#allocation2], %s195
        %p197 = pneg %p46
        %p198 = pneg %p43
        %p199 = pneg %p67
        %p200 = pneg %p64
        %p201 = pneg %p93
        %p202 = pneg %p90
        %s203 = sand.u32 %s80, 1
        %s204 = scalar_lea.sflag [#allocation4], %s203
        %s205 = sand.u32 %s80, 1
        %s206 = smul.addr %s205, 128
        %s207 = scalar_lea.vmem [#allocation7], %s206
        %p208 = pneg %p119
        %p209 = pneg %p116
        %s210 = sand.u32 %s106, 1
        %s211 = scalar_lea.sflag [#allocation9], %s210
        %s212 = sand.u32 %s106, 1
        %s213 = smul.addr %s212, 8
        %s214 = scalar_lea.vmem [#allocation8], %s213
        %s215 = smul.u32 16, %s25
        %s216 = smul.u32 16, %s25
        %v218 = vld [vmem:[%s183] sm:$0xf]
        %v219 = vld [vmem:[%s183 + $0x4] sm:$0xf]
        %v220 = vld [vmem:[%s183 + $0x8] sm:$0xf]
        %v221 = vld [vmem:[%s183 + $0xc] sm:$0xf]
        %v222 = vld [vmem:[%s183 + $0x10] sm:$0xf]
        %v223 = vld [vmem:[%s183 + $0x14] sm:$0xf]
        %v224 = vld [vmem:[%s183 + $0x18] sm:$0xf]
        %v225 = vld [vmem:[%s183 + $0x1c] sm:$0xf]
        %v226 = vld [vmem:[%s183 + $0x20] sm:$0xf]
        %v227 = vld [vmem:[%s183 + $0x24] sm:$0xf]
        %v228 = vld [vmem:[%s183 + $0x28] sm:$0xf]
        %v229 = vld [vmem:[%s183 + $0x2c] sm:$0xf]
        %v230 = vld [vmem:[%s183 + $0x30] sm:$0xf]
        %v231 = vld [vmem:[%s183 + $0x34] sm:$0xf]
        %v232 = vld [vmem:[%s183 + $0x38] sm:$0xf]
        %v233 = vld [vmem:[%s183 + $0x3c] sm:$0xf]
        %v234 = vld [vmem:[#allocation5] sm:$0xf]
        %v235 = vld [vmem:[#allocation5 + $0x4] sm:$0xf]
        %v236 = vld [vmem:[#allocation5 + $0x8] sm:$0xf]
        %v237 = vld [vmem:[#allocation5 + $0xc] sm:$0xf]
        %v238 = vld [vmem:[#allocation5 + $0x10] sm:$0xf]
        %v239 = vld [vmem:[#allocation5 + $0x14] sm:$0xf]
        %v240 = vld [vmem:[#allocation5 + $0x18] sm:$0xf]
        %v241 = vld [vmem:[#allocation5 + $0x1c] sm:$0xf]
        %v242 = vld [vmem:[#allocation5 + $0x20] sm:$0xf]
        %v243 = vld [vmem:[#allocation5 + $0x24] sm:$0xf]
        %v244 = vld [vmem:[#allocation5 + $0x28] sm:$0xf]
        %v245 = vld [vmem:[#allocation5 + $0x2c] sm:$0xf]
        %v246 = vld [vmem:[#allocation5 + $0x30] sm:$0xf]
        %v247 = vld [vmem:[#allocation5 + $0x34] sm:$0xf]
        %v248 = vld [vmem:[#allocation5 + $0x38] sm:$0xf]
        %v249 = vld [vmem:[#allocation5 + $0x3c] sm:$0xf]
        %v266 = vunpack.c.l.b16 %v218
        %v267 = vunpack.c.l.b16 %v219
        %v268 = vunpack.c.l.b16 %v220
        %v269 = vunpack.c.l.b16 %v221
        %v270 = vunpack.c.l.b16 %v222
        %v271 = vunpack.c.l.b16 %v223
        %v272 = vunpack.c.l.b16 %v224
        %v273 = vunpack.c.l.b16 %v225
        %v274 = vunpack.c.l.b16 %v226
        %v275 = vunpack.c.l.b16 %v227
        %v276 = vunpack.c.l.b16 %v228
        %v277 = vunpack.c.l.b16 %v229
        %v278 = vunpack.c.l.b16 %v230
        %v279 = vunpack.c.l.b16 %v231
        %v280 = vunpack.c.l.b16 %v232
        %v281 = vunpack.c.l.b16 %v233
        %v282 = vpack.c.b16 %v267, %v266
        %v283 = vpack.c.b16 %v269, %v268
        %v284 = vpack.c.b16 %v271, %v270
        %v285 = vpack.c.b16 %v273, %v272
        %v286 = vpack.c.b16 %v275, %v274
        %v287 = vpack.c.b16 %v277, %v276
        %v288 = vpack.c.b16 %v279, %v278
        %v289 = vpack.c.b16 %v281, %v280
        %v314 = vunpack.c.l.b16 %v234
        %v315 = vunpack.c.l.b16 %v235
        %v316 = vunpack.c.l.b16 %v236
        %v317 = vunpack.c.l.b16 %v237
        %v318 = vunpack.c.l.b16 %v238
        %v319 = vunpack.c.l.b16 %v239
        %v320 = vunpack.c.l.b16 %v240
        %v321 = vunpack.c.l.b16 %v241
        %v322 = vunpack.c.l.b16 %v242
        %v323 = vunpack.c.l.b16 %v243
        %v324 = vunpack.c.l.b16 %v244
        %v325 = vunpack.c.l.b16 %v245
        %v326 = vunpack.c.l.b16 %v246
        %v327 = vunpack.c.l.b16 %v247
        %v328 = vunpack.c.l.b16 %v248
        %v329 = vunpack.c.l.b16 %v249
        %v330 = vpack.c.b16 %v315, %v314
        %v331 = vpack.c.b16 %v317, %v316
        %v332 = vpack.c.b16 %v319, %v318
        %v333 = vpack.c.b16 %v321, %v320
        %v334 = vpack.c.b16 %v323, %v322
        %v335 = vpack.c.b16 %v325, %v324
        %v336 = vpack.c.b16 %v327, %v326
        %v337 = vpack.c.b16 %v329, %v328
        %346 = vmatprep.subr.bf16.mxu0 0
        %347 = vmatpush1.bf16.msra.mxu0 %v330
        %348 = vmatprep.subr.bf16.mxu0 0
        %349 = vmatpush1.bf16.msra.mxu0 %v331
        %350 = vmatprep.subr.bf16.mxu0 0
        %351 = vmatpush1.bf16.msra.mxu0 %v332
        %352 = vmatprep.subr.bf16.mxu0 0
        %353 = vmatpush1.bf16.msra.mxu0 %v333
        %354 = vmatprep.subr.bf16.mxu0 0
        %355 = vmatpush1.bf16.msra.mxu0 %v334
        %356 = vmatprep.subr.bf16.mxu0 0
        %357 = vmatpush1.bf16.msra.mxu0 %v335
        %358 = vmatprep.subr.bf16.mxu0 0
        %359 = vmatpush1.bf16.msra.mxu0 %v336
        %360 = vmatprep.subr.bf16.mxu0 0
        %361 = vmatpush1.bf16.msra.mxu0 %v337
        %362 = vmatprep.subr.bf16.mxu0 0
        %363 = vmatpush1.bf16.msra.mxu0 0
        %364 = vmatprep.subr.bf16.mxu0 0
        %365 = vmatpush1.bf16.msra.mxu0 0
        %366 = vmatprep.subr.bf16.mxu0 0
        %367 = vmatpush1.bf16.msra.mxu0 0
        %368 = vmatprep.subr.bf16.mxu0 0
        %369 = vmatpush1.bf16.msra.mxu0 0
        %370 = vmatprep.subr.bf16.mxu0 0
        %371 = vmatpush1.bf16.msra.mxu0 0
        %372 = vmatprep.subr.bf16.mxu0 0
        %373 = vmatpush1.bf16.msra.mxu0 0
        %374 = vmatprep.subr.bf16.mxu0 0
        %375 = vmatpush1.bf16.msra.mxu0 0
        %376 = vmatprep.subr.bf16.mxu0 0
        %377 = vmatpush1.bf16.msra.mxu0 0
        %378 = vmatprep.mubr.bf16.mxu0 0
        %379 = vmatmul.mubr.bf16.gmra.mrb[0].mxu0 %v282
        %v380 = vpop.f32.mrb[0].mxu0
        %v381 = vadd.f32 0.0, %v380
        %v382 = vpop.f32.mrb[0].mxu0
        %v383 = vpop.f32.mrb[0].mxu0
        %v384 = vadd.f32 0.0, %v383
        %v385 = vpop.f32.mrb[0].mxu0
        %386 = vmatprep.mubr.bf16.mxu0 0
        %387 = vmatmul.mubr.bf16.gmra.mrb[0].mxu0 %v283
        %v388 = vpop.f32.mrb[0].mxu0
        %v389 = vadd.f32 0.0, %v388
        %v390 = vpop.f32.mrb[0].mxu0
        %v391 = vpop.f32.mrb[0].mxu0
        %v392 = vadd.f32 0.0, %v391
        %v393 = vpop.f32.mrb[0].mxu0
        %394 = vmatprep.mubr.bf16.mxu0 0
        %395 = vmatmul.mubr.bf16.gmra.mrb[0].mxu0 %v284
        %v396 = vpop.f32.mrb[0].mxu0
        %v397 = vadd.f32 0.0, %v396
        %v398 = vpop.f32.mrb[0].mxu0
        %v399 = vpop.f32.mrb[0].mxu0
        %v400 = vadd.f32 0.0, %v399
        %v401 = vpop.f32.mrb[0].mxu0
        %402 = vmatprep.mubr.bf16.mxu0 0
        %403 = vmatmul.mubr.bf16.gmra.mrb[0].mxu0 %v285
        %v404 = vpop.f32.mrb[0].mxu0
        %v405 = vadd.f32 0.0, %v404
        %v406 = vpop.f32.mrb[0].mxu0
        %v407 = vpop.f32.mrb[0].mxu0
        %v408 = vadd.f32 0.0, %v407
        %v409 = vpop.f32.mrb[0].mxu0
        %410 = vmatprep.mubr.bf16.mxu0 0
        %411 = vmatmul.mubr.bf16.gmra.mrb[0].mxu0 %v286
        %v412 = vpop.f32.mrb[0].mxu0
        %v413 = vadd.f32 0.0, %v412
        %v414 = vpop.f32.mrb[0].mxu0
        %v415 = vpop.f32.mrb[0].mxu0
        %v416 = vadd.f32 0.0, %v415
        %v417 = vpop.f32.mrb[0].mxu0
        %418 = vmatprep.mubr.bf16.mxu0 0
        %419 = vmatmul.mubr.bf16.gmra.mrb[0].mxu0 %v287
        %v420 = vpop.f32.mrb[0].mxu0
        %v421 = vadd.f32 0.0, %v420
        %v422 = vpop.f32.mrb[0].mxu0
        %v423 = vpop.f32.mrb[0].mxu0
        %v424 = vadd.f32 0.0, %v423
        %v425 = vpop.f32.mrb[0].mxu0
        %426 = vmatprep.mubr.bf16.mxu0 0
        %427 = vmatmul.mubr.bf16.gmra.mrb[0].mxu0 %v288
        %v428 = vpop.f32.mrb[0].mxu0
        %v429 = vadd.f32 0.0, %v428
        %v430 = vpop.f32.mrb[0].mxu0
        %v431 = vpop.f32.mrb[0].mxu0
        %v432 = vadd.f32 0.0, %v431
        %v433 = vpop.f32.mrb[0].mxu0
        %434 = vmatprep.mubr.bf16.mxu0 0
        %435 = vmatmul.mubr.bf16.gmra.mrb[0].mxu0 %v289
        %v436 = vpop.f32.mrb[0].mxu0
        %v437 = vadd.f32 0.0, %v436
        %v438 = vpop.f32.mrb[0].mxu0
        %v439 = vpop.f32.mrb[0].mxu0
        %v440 = vadd.f32 0.0, %v439
        %v441 = vpop.f32.mrb[0].mxu0
        %442 = vdwg.mxu0
        %vm443 = vcmp.ge.f32.partialorder %v381, 0.0
        %vm444 = vcmp.ge.f32.partialorder %v384, 0.0
        %vm445 = vcmp.ge.f32.partialorder %v389, 0.0
        %vm446 = vcmp.ge.f32.partialorder %v392, 0.0
        %vm447 = vcmp.ge.f32.partialorder %v397, 0.0
        %vm448 = vcmp.ge.f32.partialorder %v400, 0.0
        %vm449 = vcmp.ge.f32.partialorder %v405, 0.0
        %vm450 = vcmp.ge.f32.partialorder %v408, 0.0
        %vm451 = vcmp.ge.f32.partialorder %v413, 0.0
        %vm452 = vcmp.ge.f32.partialorder %v416, 0.0
        %vm453 = vcmp.ge.f32.partialorder %v421, 0.0
        %vm454 = vcmp.ge.f32.partialorder %v424, 0.0
        %vm455 = vcmp.ge.f32.partialorder %v429, 0.0
        %vm456 = vcmp.ge.f32.partialorder %v432, 0.0
        %vm457 = vcmp.ge.f32.partialorder %v437, 0.0
        %vm458 = vcmp.ge.f32.partialorder %v440, 0.0
        %v459 = vmul.f32 %v381, 0.1
        %v460 = vmul.f32 %v384, 0.1
        %v461 = vmul.f32 %v389, 0.1
        %v462 = vmul.f32 %v392, 0.1
        %v463 = vmul.f32 %v397, 0.1
        %v464 = vmul.f32 %v400, 0.1
        %v465 = vmul.f32 %v405, 0.1
        %v466 = vmul.f32 %v408, 0.1
        %v467 = vmul.f32 %v413, 0.1
        %v468 = vmul.f32 %v416, 0.1
        %v469 = vmul.f32 %v421, 0.1
        %v470 = vmul.f32 %v424, 0.1
        %v471 = vmul.f32 %v429, 0.1
        %v472 = vmul.f32 %v432, 0.1
        %v473 = vmul.f32 %v437, 0.1
        %v474 = vmul.f32 %v440, 0.1
        %v475 = vsel %vm443, %v381, %v459
        %v476 = vsel %vm444, %v384, %v460
        %v477 = vsel %vm445, %v389, %v461
        %v478 = vsel %vm446, %v392, %v462
        %v479 = vsel %vm447, %v397, %v463
        %v480 = vsel %vm448, %v400, %v464
        %v481 = vsel %vm449, %v405, %v465
        %v482 = vsel %vm450, %v408, %v466
        %v483 = vsel %vm451, %v413, %v467
        %v484 = vsel %vm452, %v416, %v468
        %v485 = vsel %vm453, %v421, %v469
        %v486 = vsel %vm454, %v424, %v470
        %v487 = vsel %vm455, %v429, %v471
        %v488 = vsel %vm456, %v432, %v472
        %v489 = vsel %vm457, %v437, %v473
        %v490 = vsel %vm458, %v440, %v474
        %491 = vst [vmem:[%s207] sm:$0xff] %v475
        %492 = vst [vmem:[%s207 + $0x8] sm:$0xff] %v476
        %493 = vst [vmem:[%s207 + $0x10] sm:$0xff] %v477
        %494 = vst [vmem:[%s207 + $0x18] sm:$0xff] %v478
        %495 = vst [vmem:[%s207 + $0x20] sm:$0xff] %v479
        %496 = vst [vmem:[%s207 + $0x28] sm:$0xff] %v480
        %497 = vst [vmem:[%s207 + $0x30] sm:$0xff] %v481
        %498 = vst [vmem:[%s207 + $0x38] sm:$0xff] %v482
        %499 = vst [vmem:[%s207 + $0x40] sm:$0xff] %v483
        %500 = vst [vmem:[%s207 + $0x48] sm:$0xff] %v484
        %501 = vst [vmem:[%s207 + $0x50] sm:$0xff] %v485
        %502 = vst [vmem:[%s207 + $0x58] sm:$0xff] %v486
        %503 = vst [vmem:[%s207 + $0x60] sm:$0xff] %v487
        %504 = vst [vmem:[%s207 + $0x68] sm:$0xff] %v488
        %505 = vst [vmem:[%s207 + $0x70] sm:$0xff] %v489
        %506 = vst [vmem:[%s207 + $0x78] sm:$0xff] %v490
        %v507 = vadd.f32 %v475, %v476
        %v508 = vadd.f32 %v507, %v477
        %v509 = vadd.f32 %v508, %v478
        %v510 = vadd.f32 %v509, %v479
        %v511 = vadd.f32 %v510, %v480
        %v512 = vadd.f32 %v511, %v481
        %v513 = vadd.f32 %v512, %v482
        %v514 = vadd.f32 %v513, %v483
        %v515 = vadd.f32 %v514, %v484
        %v516 = vadd.f32 %v515, %v485
        %v517 = vadd.f32 %v516, %v486
        %v518 = vadd.f32 %v517, %v487
        %v519 = vadd.f32 %v518, %v488
        %v520 = vadd.f32 %v519, %v489
        %v521 = vadd.f32 %v520, %v490
        %v522 = vrot.slane %v521, 4
        %v523 = vadd.f32 %v521, %v522
        %v524 = vrot.slane %v523, 2
        %v525 = vadd.f32 %v523, %v524
        %v526 = vrot.slane %v525, 1
        %v527 = vadd.f32 %v525, %v526
        %v528 = vmul.f32 %v475, %v475
        %v529 = vmul.f32 %v476, %v476
        %v530 = vmul.f32 %v477, %v477
        %v531 = vmul.f32 %v478, %v478
        %v532 = vmul.f32 %v479, %v479
        %v533 = vmul.f32 %v480, %v480
        %v534 = vmul.f32 %v481, %v481
        %v535 = vmul.f32 %v482, %v482
        %v536 = vmul.f32 %v483, %v483
        %v537 = vmul.f32 %v484, %v484
        %v538 = vmul.f32 %v485, %v485
        %v539 = vmul.f32 %v486, %v486
        %v540 = vmul.f32 %v487, %v487
        %v541 = vmul.f32 %v488, %v488
        %v542 = vmul.f32 %v489, %v489
        %v543 = vmul.f32 %v490, %v490
        %v544 = vadd.f32 %v528, %v529
        %v545 = vadd.f32 %v544, %v530
        %v546 = vadd.f32 %v545, %v531
        %v547 = vadd.f32 %v546, %v532
        %v548 = vadd.f32 %v547, %v533
        %v549 = vadd.f32 %v548, %v534
        %v550 = vadd.f32 %v549, %v535
        %v551 = vadd.f32 %v550, %v536
        %v552 = vadd.f32 %v551, %v537
        %v553 = vadd.f32 %v552, %v538
        %v554 = vadd.f32 %v553, %v539
        %v555 = vadd.f32 %v554, %v540
        %v556 = vadd.f32 %v555, %v541
        %v557 = vadd.f32 %v556, %v542
        %v558 = vadd.f32 %v557, %v543
        %v559 = vrot.slane %v558, 4
        %v560 = vadd.f32 %v558, %v559
        %v561 = vrot.slane %v560, 2
        %v562 = vadd.f32 %v560, %v561
        %v563 = vrot.slane %v562, 1
        %v564 = vadd.f32 %v562, %v563
        %vm565 = vcmask 1040384
        %v566 = vsel %vm565, %v527, %v564
        %vm567 = vcmask 1041408
        %v568 = vsel %vm567, %v566, 0.0
        %569 = vst [vmem:[%s214] sm:$0xff] %v568
        %s570 = sand.u32 %s80, 1
        %s571 = scalar_lea.sflag [#allocation4], %s570
        %s572 = sand.u32 %s80, 1
        %s573 = smul.addr %s572, 128
        %s574 = scalar_lea.vmem [#allocation7], %s573
        %s575 = sand.u32 %s106, 1
        %s576 = scalar_lea.sflag [#allocation9], %s575
        %s577 = sand.u32 %s106, 1
        %s578 = smul.addr %s577, 8
        %s579 = scalar_lea.vmem [#allocation8], %s578
        // Predicated region
        $region37: #{tpu_custom_call.1} parent=27 // pred_check
          %p580 = pneg %p90
        $region38: #{tpu_custom_call.1} parent=27 // pred_check_branch
          %582 = sbr.rel (%p580) target = $region40
        $region39: #{tpu_custom_call.1} parent=27 // pred_region
          %s583 = smul.u32 16, %s25
          %s585 = ssub.s32 2048, 2048
          %586 = vsyncadd %s571, %s585
          %s587 = smul.addr %s583, 128
          %s588 = scalar_lea.hbm %s2, %s587
          %s589 = sshll.u32 %s574, 4
          %s590 = int_to_ptr.vmem [resolvable:$true] %s589
          %595 = dma.vmem_to_hbm [thread:$0]  %s590, 2048, %s588, %s571, 128, 128, 8
        $region40: #{tpu_custom_call.1} parent=27 // pred_fallthru
          _
        // Predicated region
        $region41: #{tpu_custom_call.1} parent=27 // pred_check
          %p596 = pneg %p116
        $region42: #{tpu_custom_call.1} parent=27 // pred_check_branch
          %598 = sbr.rel (%p596) target = $region44
        $region43: #{tpu_custom_call.1} parent=27 // pred_region
          %s600 = ssub.s32 128, 128
          %601 = vsyncadd %s576, %s600
          %s602 = smul.addr %s25, 128
          %s603 = scalar_lea.hbm %s3, %s602
          %s605 = sshll.u32 %s579, 4
          %s606 = int_to_ptr.vmem [resolvable:$true] %s605
          %608 = dma.vmem_to_hbm [thread:$0]  %s606, 128, %s603, %s576
        $region44: #{tpu_custom_call.1} parent=27 // pred_fallthru
          _
      $region28: #{tpu_custom_call.1} parent=5 // pred_fallthru
        _
      %p609 = scmp.le.s32.totalorder 2, %s20
      // Predicated region
      $region45: #{tpu_custom_call.1} parent=5 // pred_check
        %p610 = pneg %p609
      $region46: #{tpu_custom_call.1} parent=5 // pred_check_branch
        %612 = sbr.rel (%p610) target = $region48
      $region47: #{tpu_custom_call.1} parent=5 // pred_region
        %s613 = ssub.s32 %s20, 2
        // Predicated region
        $region49: #{tpu_custom_call.1} parent=47 // pred_check
          %p614 = pneg %p96
        $region50: #{tpu_custom_call.1} parent=47 // pred_check_branch
          %616 = sbr.rel (%p614) target = $region52
        $region51: #{tpu_custom_call.1} parent=47 // pred_region
          %s617 = sand.u32 %s81, 1
          %s618 = scalar_lea.sflag [#allocation4], %s617
          %s619 = sand.u32 %s81, 1
          %s620 = smul.addr %s619, 128
          %s621 = scalar_lea.vmem [#allocation7], %s620
          %622 = dma.done %s618, 2048
        $region52: #{tpu_custom_call.1} parent=47 // pred_fallthru
          _
        // Predicated region
        $region53: #{tpu_custom_call.1} parent=47 // pred_check
          %p623 = pneg %p122
        $region54: #{tpu_custom_call.1} parent=47 // pred_check_branch
          %625 = sbr.rel (%p623) target = $region56
        $region55: #{tpu_custom_call.1} parent=47 // pred_region
          %s626 = sand.u32 %s107, 1
          %s627 = scalar_lea.sflag [#allocation9], %s626
          %s628 = sand.u32 %s107, 1
          %s629 = smul.addr %s628, 8
          %s630 = scalar_lea.vmem [#allocation8], %s629
          %631 = dma.done %s627, 128
        $region56: #{tpu_custom_call.1} parent=47 // pred_fallthru
          _
      $region48: #{tpu_custom_call.1} parent=5 // pred_fallthru
        _
    $region6: #{tpu_custom_call.1} parent=1 // loop_footer
      %s24 = sadd.s32 1, %s20
    $region7: #{tpu_custom_call.1} parent=1 // loop_footer_branch
      %19 = sbr.rel target = $region3
    $region8: #{tpu_custom_call.1} parent=1 // loop_exit
      _
    %632 = vsyncpa [#allocation3], 1
    %s633 = scalar_lea.sflag [#allocation3], 1
    %634 = vsyncpa %s633, 1
    %635 = vsyncpa [#allocation6], 1
    %636 = vsyncpa [#allocation4], 1
    %s637 = scalar_lea.sflag [#allocation4], 1
    %638 = vsyncpa %s637, 1
    %639 = vsyncpa [#allocation9], 1
    %s640 = scalar_lea.sflag [#allocation9], 1
    %641 = vsyncpa %s640, 1

</llo_original>
